<compile_context>
chip_gen: v5e
topology: v5e:2x2
jax: 0.10.0
libtpu: 0.0.40
codegen_flags: <defaults>
</compile_context>

<pallas_src>
import math

import jax
import jax.numpy as jnp
import numpy as np
from jax.experimental import pallas as pl
from jax.experimental.pallas import tpu as pltpu


def _round_up(a, b):
    return (a + b - 1) // b * b


# ---------------------------------------------------------------------------
# Pass 1: hoisted x-side projection  G = x2d @ W_x   with W_x = [Wrx | Wzx | Wnx]
# Embarrassingly parallel over row tiles -> "parallel" grid (uses both TCs on v7x).
# ---------------------------------------------------------------------------
def _xproj_kernel(x_ref, w_ref, o_ref):
    o_ref[...] = jnp.dot(x_ref[...], w_ref[...], preferred_element_type=jnp.float32)


# ---------------------------------------------------------------------------
# Pass 2: sequential recurrence, T timesteps per grid step.
#   g_ref:   (T, B, 3H)  precomputed x-side pre-activations [rt_x | zt_x | nt_x]
#   wrz_ref: (H, 2H)     fused [Wrh | Wzh]
#   wnh_ref: (H, H)
#   out_ref: (T, B, H)
#   h_sc:    (B, H)      recurrent hidden state, persists across grid steps
# ---------------------------------------------------------------------------
def _sgru_recurrent_kernel(g_ref, wrz_ref, wnh_ref, out_ref, h_sc):
    c = pl.program_id(0)

    @pl.when(c == 0)
    def _():
        h_sc[...] = jnp.zeros_like(h_sc)

    T = g_ref.shape[0]
    H = wnh_ref.shape[0]

    wrz = wrz_ref[...]          # (H, 2H)   loaded once per chunk
    wnh = wnh_ref[...]          # (H, H)

    h = h_sc[...]               # (B, H)
    # Static unroll over the T in-chunk steps (small, fixed trip count).
    for i in range(T):
        g_i = g_ref[i]                                                  # (B, 3H)
        # rt/zt from ONE fused h-side matmul.
        rz = g_i[:, : 2 * H] + jnp.dot(h, wrz,
                                       preferred_element_type=jnp.float32)
        # reset_gate * h  ==  select (exact: heaviside gate).
        rh = jnp.where(rz[:, :H] >= 0.0, h, 0.0)
        nt = g_i[:, 2 * H:] + jnp.dot(rh, wnh,
                                      preferred_element_type=jnp.float32)
        # z*h + (1-z)*cand  ==  select; keeps the ">= 0 -> keep h" convention.
        h = jnp.where(rz[:, H:] >= 0.0, h, (nt >= 0.0).astype(jnp.float32))
        out_ref[i] = h.astype(out_ref.dtype)

    h_sc[...] = h


def sgru_forward(x, w_reset, w_update, w_new, *, chunk=8):
    """x: (B, L, D) float32. w_*: (H, D + H) torch-style Linear weights (no bias).

    Returns (outputs (B, L, H), h_last (B, H)) exactly like the PyTorch module.
    Requires D == H (as the PyTorch forward implicitly does).
    """
    B, L, D = x.shape
    H = w_reset.shape[0]
    assert D == H, "SGRU forward requires input_size == hidden_size"
    assert w_reset.shape == (H, D + H)

    f32 = jnp.float32

    # Pack weights: x-side fused into (D, 3H); h-side reset/update fused into (H, 2H).
    w_x = jnp.concatenate(
        [w_reset[:, :D].T, w_update[:, :D].T, w_new[:, :D].T], axis=1).astype(f32)   # (D, 3H)
    w_rz = jnp.concatenate(
        [w_reset[:, D:].T, w_update[:, D:].T], axis=1).astype(f32)                   # (H, 2H)
    w_nh = w_new[:, D:].T.astype(f32)                                                # (H, H)

    # Time-major, padded to a multiple of the chunk size.
    T = min(chunk, L)
    L_pad = _round_up(L, T)
    x_tm = jnp.transpose(x, (1, 0, 2)).astype(f32)                  # (L, B, D)
    if L_pad != L:
        x_tm = jnp.pad(x_tm, ((0, L_pad - L), (0, 0), (0, 0)))

    # ---- Pass 1: one big batched projection over all timesteps (parallel grid) ----
    M = L_pad * B
    x2d = x_tm.reshape(M, D)
    tm = min(256, _round_up(M, 8))
    M_pad = _round_up(M, tm)
    if M_pad != M:
        x2d = jnp.pad(x2d, ((0, M_pad - M), (0, 0)))

    g2d = pl.pallas_call(
        _xproj_kernel,
        out_shape=jax.ShapeDtypeStruct((M_pad, 3 * H), f32),
        grid_spec=pltpu.PrefetchScalarGridSpec(
            num_scalar_prefetch=0,
            grid=(M_pad // tm,),
            in_specs=[
                pl.BlockSpec((tm, D), lambda i: (i, 0)),
                pl.BlockSpec((D, 3 * H), lambda i: (0, 0)),   # resident weights
            ],
            out_specs=pl.BlockSpec((tm, 3 * H), lambda i: (i, 0)),
        ),
        compiler_params=pltpu.CompilerParams(
            dimension_semantics=("parallel",),                # shards across TCs on v7x
        ),
    )(x2d, w_x)
    g_tm = g2d[:M].reshape(L_pad, B, 3 * H)

    # ---- Pass 2: sequential recurrence, T steps per grid iteration ----
    # Note: for large H, cast w_rz/w_nh to bf16 (exact: h is binary) and use
    # pipeline_mode=pl.Buffered(1) on the constant weight blocks to fit v7x's 64 MiB VMEM.
    out_tm = pl.pallas_call(
        _sgru_recurrent_kernel,
        out_shape=jax.ShapeDtypeStruct((L_pad, B, H), f32),
        grid_spec=pltpu.PrefetchScalarGridSpec(
            num_scalar_prefetch=0,
            grid=(L_pad // T,),
            in_specs=[
                pl.BlockSpec((T, B, 3 * H), lambda c: (c, 0, 0)),   # chunk of G
                pl.BlockSpec((H, 2 * H), lambda c: (0, 0)),         # fused [Wrh|Wzh]
                pl.BlockSpec((H, H), lambda c: (0, 0)),             # Wnh
            ],
            out_specs=pl.BlockSpec((T, B, H), lambda c: (c, 0, 0)),
            scratch_shapes=[pltpu.VMEM((B, H), f32)],               # recurrent h
        ),
        compiler_params=pltpu.CompilerParams(
            dimension_semantics=("arbitrary",),                     # true recurrence
        ),
    )(g_tm, w_rz, w_nh)

    outputs = jnp.transpose(out_tm[:L], (1, 0, 2))   # (B, L, H)
    h_last = outputs[:, L - 1, :]
    return outputs, h_last


def _sgru_reference(x, w_reset, w_update, w_new):
    """Pure-JAX reference mirroring the PyTorch forward loop."""
    B, L, D = x.shape
    H = w_reset.shape[0]
    heav = lambda v: (v >= 0.0).astype(jnp.float32)

    def step(h, x_t):
        combined = jnp.concatenate([x_t, h], axis=1)
        rt = combined @ w_reset.T
        zt = combined @ w_update.T
        r = heav(rt)
        z = heav(zt)
        nt = jnp.concatenate([x_t, r * h], axis=1) @ w_new.T
        cand = heav(nt)
        h_new = z * h + (1.0 - z) * cand
        return h_new, h_new

    h0 = jnp.zeros((B, H), jnp.float32)
    h_last, outs = jax.lax.scan(step, h0, jnp.transpose(x, (1, 0, 2)))
    return jnp.transpose(outs, (1, 0, 2)), h_last


if __name__ == "__main__":
    B, L, D = 2, 8, 32          # input_size == hidden_size == D (required by the forward)
    H = D
    stdv = 1.0 / math.sqrt(H)

    key = jax.random.PRNGKey(0)
    kx, kr, kz, kn = jax.random.split(key, 4)
    x = jax.random.normal(kx, (B, L, D), dtype=jnp.float32)
    w_reset = jax.random.uniform(kr, (H, D + H), jnp.float32, -stdv, stdv)
    w_update = jax.random.uniform(kz, (H, D + H), jnp.float32, -stdv, stdv)
    w_new = jax.random.uniform(kn, (H, D + H), jnp.float32, -stdv, stdv)

    fwd = jax.jit(sgru_forward)
    out, h_last = jax.block_until_ready(fwd(x, w_reset, w_update, w_new))

    ref_out, ref_h = _sgru_reference(x, w_reset, w_update, w_new)
    np.testing.assert_allclose(np.asarray(out), np.asarray(ref_out), rtol=1e-5, atol=1e-5)
    np.testing.assert_allclose(np.asarray(h_last), np.asarray(ref_h), rtol=1e-5, atol=1e-5)

    print("KERNEL_OK")
</pallas_src>

<mosaic_0001>
module attributes {stable_mosaic.version = 11 : i64} {
  func.func @_xproj_kernel(%arg0: i32, %arg1: memref<16x32xf32, #tpu.memory_space<vmem>>, %arg2: memref<32x96xf32, #tpu.memory_space<vmem>>, %arg3: memref<16x96xf32, #tpu.memory_space<vmem>>) attributes {dimension_semantics = [#tpu.dimension_semantics<parallel>], iteration_bounds = array<i64: 1>, scalar_prefetch = 0 : i64, scratch_operands = 0 : i64, tpu.core_type = #tpu.core_type<tc>, window_params = [{transform_indices = @transform_0, window_bounds = array<i64: 16, 32>}, {pipeline_mode = #tpu.pipeline_mode<synchronous>, transform_indices = @transform_1, window_bounds = array<i64: 32, 96>}, {transform_indices = @transform_2, window_bounds = array<i64: 16, 96>}]} {
    %c0 = arith.constant 0 : index
    %c0_0 = arith.constant 0 : index
    %0 = vector.load %arg1[%c0, %c0_0] : memref<16x32xf32, #tpu.memory_space<vmem>>, vector<16x32xf32>
    %c0_1 = arith.constant 0 : index
    %c0_2 = arith.constant 0 : index
    %1 = vector.load %arg2[%c0_1, %c0_2] : memref<32x96xf32, #tpu.memory_space<vmem>>, vector<32x96xf32>
    %cst = arith.constant dense<0.000000e+00> : vector<16x96xf32>
    %2 = tpu.matmul %0, %1, %cst {dimension_numbers = #tpu.dot_dimension_numbers<[1], [0], [0], [1], [0, 0, 1, 1], [], []>} : vector<16x32xf32>, vector<32x96xf32>, vector<16x96xf32> -> vector<16x96xf32>
    %c0_3 = arith.constant 0 : index
    %c0_4 = arith.constant 0 : index
    %3 = vector.load %arg3[%c0_3, %c0_4] : memref<16x96xf32, #tpu.memory_space<vmem>>, vector<16x96xf32>
    tpu.vector_store %arg3[%c0_3, %c0_4], %2 {strides = array<i32>} : memref<16x96xf32, #tpu.memory_space<vmem>>, vector<16x96xf32>,
    return
  }
  func.func @transform_0(%arg0: i32) -> (i32, i32) {
    %c0_i32 = arith.constant 0 : i32
    %c0_i32_0 = arith.constant 0 : i32
    return %arg0, %c0_i32 : i32, i32
  }
  func.func @transform_1(%arg0: i32) -> (i32, i32) {
    %c0_i32 = arith.constant 0 : i32
    %c0_i32_0 = arith.constant 0 : i32
    %c0_i32_1 = arith.constant 0 : i32
    return %c0_i32, %c0_i32_0 : i32, i32
  }
  func.func @transform_2(%arg0: i32) -> (i32, i32) {
    %c0_i32 = arith.constant 0 : i32
    %c0_i32_0 = arith.constant 0 : i32
    return %arg0, %c0_i32 : i32, i32
  }
}

module attributes {stable_mosaic.version = 11 : i64} {
  func.func @_sgru_recurrent_kernel(%arg0: i32, %arg1: memref<8x2x96xf32, #tpu.memory_space<vmem>>, %arg2: memref<32x64xf32, #tpu.memory_space<vmem>>, %arg3: memref<32x32xf32, #tpu.memory_space<vmem>>, %arg4: memref<8x2x32xf32, #tpu.memory_space<vmem>>, %arg5: memref<2x32xf32, #tpu.memory_space<vmem>>) attributes {dimension_semantics = [#tpu.dimension_semantics<arbitrary>], iteration_bounds = array<i64: 1>, scalar_prefetch = 0 : i64, scratch_operands = 1 : i64, tpu.core_type = #tpu.core_type<tc>, window_params = [{transform_indices = @transform_0, window_bounds = array<i64: 8, 2, 96>}, {pipeline_mode = #tpu.pipeline_mode<synchronous>, transform_indices = @transform_1, window_bounds = array<i64: 32, 64>}, {pipeline_mode = #tpu.pipeline_mode<synchronous>, transform_indices = @transform_2, window_bounds = array<i64: 32, 32>}, {transform_indices = @transform_3, window_bounds = array<i64: 8, 2, 32>}]} {
    %c0_i32 = arith.constant 0 : i32
    %0 = arith.cmpi eq, %arg0, %c0_i32 : i32
    %1 = arith.extui %0 : i1 to i32
    %c0_i32_0 = arith.constant 0 : i32
    %2 = arith.cmpi ne, %1, %c0_i32_0 : i32
    scf.if %2 {
      %cst_96 = arith.constant 0.000000e+00 : f32
      %199 = vector.broadcast %cst_96 : f32 to vector<2x32xf32>
      %c0_97 = arith.constant 0 : index
      %c0_98 = arith.constant 0 : index
      %200 = vector.load %arg5[%c0_97, %c0_98] : memref<2x32xf32, #tpu.memory_space<vmem>>, vector<2x32xf32>
      tpu.vector_store %arg5[%c0_97, %c0_98], %199 {strides = array<i32>} : memref<2x32xf32, #tpu.memory_space<vmem>>, vector<2x32xf32>,
    } else {
    }
    %c0 = arith.constant 0 : index
    %c0_1 = arith.constant 0 : index
    %3 = vector.load %arg2[%c0, %c0_1] : memref<32x64xf32, #tpu.memory_space<vmem>>, vector<32x64xf32>
    %c0_2 = arith.constant 0 : index
    %c0_3 = arith.constant 0 : index
    %4 = vector.load %arg3[%c0_2, %c0_3] : memref<32x32xf32, #tpu.memory_space<vmem>>, vector<32x32xf32>
    %c0_4 = arith.constant 0 : index
    %c0_5 = arith.constant 0 : index
    %5 = vector.load %arg5[%c0_4, %c0_5] : memref<2x32xf32, #tpu.memory_space<vmem>>, vector<2x32xf32>
    %c0_6 = arith.constant 0 : index
    %c0_7 = arith.constant 0 : index
    %c0_8 = arith.constant 0 : index
    %6 = vector.load %arg1[%c0_6, %c0_7, %c0_8] : memref<8x2x96xf32, #tpu.memory_space<vmem>>, vector<1x2x96xf32>
    %7 = vector.shape_cast %6 : vector<1x2x96xf32> to vector<2x96xf32>
    %8 = vector.extract_strided_slice %7 {offsets = [0, 0], sizes = [2, 64], strides = [1, 1]} : vector<2x96xf32> to vector<2x64xf32>
    %cst = arith.constant dense<0.000000e+00> : vector<2x64xf32>
    %9 = tpu.matmul %5, %3, %cst {dimension_numbers = #tpu.dot_dimension_numbers<[1], [0], [0], [1], [0, 0, 1, 1], [], []>} : vector<2x32xf32>, vector<32x64xf32>, vector<2x64xf32> -> vector<2x64xf32>
    %10 = arith.addf %8, %9 : vector<2x64xf32>
    %11 = vector.extract_strided_slice %10 {offsets = [0, 0], sizes = [2, 32], strides = [1, 1]} : vector<2x64xf32> to vector<2x32xf32>
    %cst_9 = arith.constant 0.000000e+00 : f32
    %12 = vector.broadcast %cst_9 : f32 to vector<2x32xf32>
    %13 = arith.cmpf oge, %11, %12 : vector<2x32xf32>
    %cst_10 = arith.constant 0.000000e+00 : f32
    %14 = vector.broadcast %cst_10 : f32 to vector<2x32xf32>
    %15 = arith.select %13, %5, %14 : vector<2x32xi1>, vector<2x32xf32>
    %16 = vector.extract_strided_slice %7 {offsets = [0, 64], sizes = [2, 32], strides = [1, 1]} : vector<2x96xf32> to vector<2x32xf32>
    %cst_11 = arith.constant dense<0.000000e+00> : vector<2x32xf32>
    %17 = tpu.matmul %15, %4, %cst_11 {dimension_numbers = #tpu.dot_dimension_numbers<[1], [0], [0], [1], [0, 0, 1, 1], [], []>} : vector<2x32xf32>, vector<32x32xf32>, vector<2x32xf32> -> vector<2x32xf32>
    %18 = arith.addf %16, %17 : vector<2x32xf32>
    %19 = vector.extract_strided_slice %10 {offsets = [0, 32], sizes = [2, 32], strides = [1, 1]} : vector<2x64xf32> to vector<2x32xf32>
    %cst_12 = arith.constant 0.000000e+00 : f32
    %20 = vector.broadcast %cst_12 : f32 to vector<2x32xf32>
    %21 = arith.cmpf oge, %19, %20 : vector<2x32xf32>
    %cst_13 = arith.constant 0.000000e+00 : f32
    %22 = vector.broadcast %cst_13 : f32 to vector<2x32xf32>
    %23 = arith.cmpf oge, %18, %22 : vector<2x32xf32>
    %24 = arith.extui %23 : vector<2x32xi1> to vector<2x32xi32>
    %25 = arith.sitofp %24 : vector<2x32xi32> to vector<2x32xf32>
    %26 = arith.select %21, %5, %25 : vector<2x32xi1>, vector<2x32xf32>
    %c0_14 = arith.constant 0 : index
    %c0_15 = arith.constant 0 : index
    %c0_16 = arith.constant 0 : index
    %27 = vector.load %arg4[%c0_14, %c0_15, %c0_16] : memref<8x2x32xf32, #tpu.memory_space<vmem>>, vector<1x2x32xf32>
    %28 = vector.shape_cast %27 : vector<1x2x32xf32> to vector<2x32xf32>
    %29 = vector.shape_cast %26 : vector<2x32xf32> to vector<1x2x32xf32>
    tpu.vector_store %arg4[%c0_14, %c0_15, %c0_16], %29 {strides = array<i32>} : memref<8x2x32xf32, #tpu.memory_space<vmem>>, vector<1x2x32xf32>,
    %c1 = arith.constant 1 : index
    %c0_17 = arith.constant 0 : index
    %c0_18 = arith.constant 0 : index
    %30 = vector.load %arg1[%c1, %c0_17, %c0_18] : memref<8x2x96xf32, #tpu.memory_space<vmem>>, vector<1x2x96xf32>
    %31 = vector.shape_cast %30 : vector<1x2x96xf32> to vector<2x96xf32>
    %32 = vector.extract_strided_slice %31 {offsets = [0, 0], sizes = [2, 64], strides = [1, 1]} : vector<2x96xf32> to vector<2x64xf32>
    %cst_19 = arith.constant dense<0.000000e+00> : vector<2x64xf32>
    %33 = tpu.matmul %26, %3, %cst_19 {dimension_numbers = #tpu.dot_dimension_numbers<[1], [0], [0], [1], [0, 0, 1, 1], [], []>} : vector<2x32xf32>, vector<32x64xf32>, vector<2x64xf32> -> vector<2x64xf32>
    %34 = arith.addf %32, %33 : vector<2x64xf32>
    %35 = vector.extract_strided_slice %34 {offsets = [0, 0], sizes = [2, 32], strides = [1, 1]} : vector<2x64xf32> to vector<2x32xf32>
    %cst_20 = arith.constant 0.000000e+00 : f32
    %36 = vector.broadcast %cst_20 : f32 to vector<2x32xf32>
    %37 = arith.cmpf oge, %35, %36 : vector<2x32xf32>
    %cst_21 = arith.constant 0.000000e+00 : f32
    %38 = vector.broadcast %cst_21 : f32 to vector<2x32xf32>
    %39 = arith.select %37, %26, %38 : vector<2x32xi1>, vector<2x32xf32>
    %40 = vector.extract_strided_slice %31 {offsets = [0, 64], sizes = [2, 32], strides = [1, 1]} : vector<2x96xf32> to vector<2x32xf32>
    %cst_22 = arith.constant dense<0.000000e+00> : vector<2x32xf32>
    %41 = tpu.matmul %39, %4, %cst_22 {dimension_numbers = #tpu.dot_dimension_numbers<[1], [0], [0], [1], [0, 0, 1, 1], [], []>} : vector<2x32xf32>, vector<32x32xf32>, vector<2x32xf32> -> vector<2x32xf32>
    %42 = arith.addf %40, %41 : vector<2x32xf32>
    %43 = vector.extract_strided_slice %34 {offsets = [0, 32], sizes = [2, 32], strides = [1, 1]} : vector<2x64xf32> to vector<2x32xf32>
    %cst_23 = arith.constant 0.000000e+00 : f32
    %44 = vector.broadcast %cst_23 : f32 to vector<2x32xf32>
    %45 = arith.cmpf oge, %43, %44 : vector<2x32xf32>
    %cst_24 = arith.constant 0.000000e+00 : f32
    %46 = vector.broadcast %cst_24 : f32 to vector<2x32xf32>
    %47 = arith.cmpf oge, %42, %46 : vector<2x32xf32>
    %48 = arith.extui %47 : vector<2x32xi1> to vector<2x32xi32>
    %49 = arith.sitofp %48 : vector<2x32xi32> to vector<2x32xf32>
    %50 = arith.select %45, %26, %49 : vector<2x32xi1>, vector<2x32xf32>
    %c1_25 = arith.constant 1 : index
    %c0_26 = arith.constant 0 : index
    %c0_27 = arith.constant 0 : index
    %51 = vector.load %arg4[%c1_25, %c0_26, %c0_27] : memref<8x2x32xf32, #tpu.memory_space<vmem>>, vector<1x2x32xf32>
    %52 = vector.shape_cast %51 : vector<1x2x32xf32> to vector<2x32xf32>
    %53 = vector.shape_cast %50 : vector<2x32xf32> to vector<1x2x32xf32>
    tpu.vector_store %arg4[%c1_25, %c0_26, %c0_27], %53 {strides = array<i32>} : memref<8x2x32xf32, #tpu.memory_space<vmem>>, vector<1x2x32xf32>,
    %c2 = arith.constant 2 : index
    %c0_28 = arith.constant 0 : index
    %c0_29 = arith.constant 0 : index
    %54 = vector.load %arg1[%c2, %c0_28, %c0_29] : memref<8x2x96xf32, #tpu.memory_space<vmem>>, vector<1x2x96xf32>
    %55 = vector.shape_cast %54 : vector<1x2x96xf32> to vector<2x96xf32>
    %56 = vector.extract_strided_slice %55 {offsets = [0, 0], sizes = [2, 64], strides = [1, 1]} : vector<2x96xf32> to vector<2x64xf32>
    %cst_30 = arith.constant dense<0.000000e+00> : vector<2x64xf32>
    %57 = tpu.matmul %50, %3, %cst_30 {dimension_numbers = #tpu.dot_dimension_numbers<[1], [0], [0], [1], [0, 0, 1, 1], [], []>} : vector<2x32xf32>, vector<32x64xf32>, vector<2x64xf32> -> vector<2x64xf32>
    %58 = arith.addf %56, %57 : vector<2x64xf32>
    %59 = vector.extract_strided_slice %58 {offsets = [0, 0], sizes = [2, 32], strides = [1, 1]} : vector<2x64xf32> to vector<2x32xf32>
    %cst_31 = arith.constant 0.000000e+00 : f32
    %60 = vector.broadcast %cst_31 : f32 to vector<2x32xf32>
    %61 = arith.cmpf oge, %59, %60 : vector<2x32xf32>
    %cst_32 = arith.constant 0.000000e+00 : f32
    %62 = vector.broadcast %cst_32 : f32 to vector<2x32xf32>
    %63 = arith.select %61, %50, %62 : vector<2x32xi1>, vector<2x32xf32>
    %64 = vector.extract_strided_slice %55 {offsets = [0, 64], sizes = [2, 32], strides = [1, 1]} : vector<2x96xf32> to vector<2x32xf32>
    %cst_33 = arith.constant dense<0.000000e+00> : vector<2x32xf32>
    %65 = tpu.matmul %63, %4, %cst_33 {dimension_numbers = #tpu.dot_dimension_numbers<[1], [0], [0], [1], [0, 0, 1, 1], [], []>} : vector<2x32xf32>, vector<32x32xf32>, vector<2x32xf32> -> vector<2x32xf32>
    %66 = arith.addf %64, %65 : vector<2x32xf32>
    %67 = vector.extract_strided_slice %58 {offsets = [0, 32], sizes = [2, 32], strides = [1, 1]} : vector<2x64xf32> to vector<2x32xf32>
    %cst_34 = arith.constant 0.000000e+00 : f32
    %68 = vector.broadcast %cst_34 : f32 to vector<2x32xf32>
    %69 = arith.cmpf oge, %67, %68 : vector<2x32xf32>
    %cst_35 = arith.constant 0.000000e+00 : f32
    %70 = vector.broadcast %cst_35 : f32 to vector<2x32xf32>
    %71 = arith.cmpf oge, %66, %70 : vector<2x32xf32>
    %72 = arith.extui %71 : vector<2x32xi1> to vector<2x32xi32>
    %73 = arith.sitofp %72 : vector<2x32xi32> to vector<2x32xf32>
    %74 = arith.select %69, %50, %73 : vector<2x32xi1>, vector<2x32xf32>
    %c2_36 = arith.constant 2 : index
    %c0_37 = arith.constant 0 : index
    %c0_38 = arith.constant 0 : index
    %75 = vector.load %arg4[%c2_36, %c0_37, %c0_38] : memref<8x2x32xf32, #tpu.memory_space<vmem>>, vector<1x2x32xf32>
    %76 = vector.shape_cast %75 : vector<1x2x32xf32> to vector<2x32xf32>
    %77 = vector.shape_cast %74 : vector<2x32xf32> to vector<1x2x32xf32>
    tpu.vector_store %arg4[%c2_36, %c0_37, %c0_38], %77 {strides = array<i32>} : memref<8x2x32xf32, #tpu.memory_space<vmem>>, vector<1x2x32xf32>,
    %c3 = arith.constant 3 : index
    %c0_39 = arith.constant 0 : index
    %c0_40 = arith.constant 0 : index
    %78 = vector.load %arg1[%c3, %c0_39, %c0_40] : memref<8x2x96xf32, #tpu.memory_space<vmem>>, vector<1x2x96xf32>
    %79 = vector.shape_cast %78 : vector<1x2x96xf32> to vector<2x96xf32>
    %80 = vector.extract_strided_slice %79 {offsets = [0, 0], sizes = [2, 64], strides = [1, 1]} : vector<2x96xf32> to vector<2x64xf32>
    %cst_41 = arith.constant dense<0.000000e+00> : vector<2x64xf32>
    %81 = tpu.matmul %74, %3, %cst_41 {dimension_numbers = #tpu.dot_dimension_numbers<[1], [0], [0], [1], [0, 0, 1, 1], [], []>} : vector<2x32xf32>, vector<32x64xf32>, vector<2x64xf32> -> vector<2x64xf32>
    %82 = arith.addf %80, %81 : vector<2x64xf32>
    %83 = vector.extract_strided_slice %82 {offsets = [0, 0], sizes = [2, 32], strides = [1, 1]} : vector<2x64xf32> to vector<2x32xf32>
    %cst_42 = arith.constant 0.000000e+00 : f32
    %84 = vector.broadcast %cst_42 : f32 to vector<2x32xf32>
    %85 = arith.cmpf oge, %83, %84 : vector<2x32xf32>
    %cst_43 = arith.constant 0.000000e+00 : f32
    %86 = vector.broadcast %cst_43 : f32 to vector<2x32xf32>
    %87 = arith.select %85, %74, %86 : vector<2x32xi1>, vector<2x32xf32>
    %88 = vector.extract_strided_slice %79 {offsets = [0, 64], sizes = [2, 32], strides = [1, 1]} : vector<2x96xf32> to vector<2x32xf32>
    %cst_44 = arith.constant dense<0.000000e+00> : vector<2x32xf32>
    %89 = tpu.matmul %87, %4, %cst_44 {dimension_numbers = #tpu.dot_dimension_numbers<[1], [0], [0], [1], [0, 0, 1, 1], [], []>} : vector<2x32xf32>, vector<32x32xf32>, vector<2x32xf32> -> vector<2x32xf32>
    %90 = arith.addf %88, %89 : vector<2x32xf32>
    %91 = vector.extract_strided_slice %82 {offsets = [0, 32], sizes = [2, 32], strides = [1, 1]} : vector<2x64xf32> to vector<2x32xf32>
    %cst_45 = arith.constant 0.000000e+00 : f32
    %92 = vector.broadcast %cst_45 : f32 to vector<2x32xf32>
    %93 = arith.cmpf oge, %91, %92 : vector<2x32xf32>
    %cst_46 = arith.constant 0.000000e+00 : f32
    %94 = vector.broadcast %cst_46 : f32 to vector<2x32xf32>
    %95 = arith.cmpf oge, %90, %94 : vector<2x32xf32>
    %96 = arith.extui %95 : vector<2x32xi1> to vector<2x32xi32>
    %97 = arith.sitofp %96 : vector<2x32xi32> to vector<2x32xf32>
    %98 = arith.select %93, %74, %97 : vector<2x32xi1>, vector<2x32xf32>
    %c3_47 = arith.constant 3 : index
    %c0_48 = arith.constant 0 : index
    %c0_49 = arith.constant 0 : index
    %99 = vector.load %arg4[%c3_47, %c0_48, %c0_49] : memref<8x2x32xf32, #tpu.memory_space<vmem>>, vector<1x2x32xf32>
    %100 = vector.shape_cast %99 : vector<1x2x32xf32> to vector<2x32xf32>
    %101 = vector.shape_cast %98 : vector<2x32xf32> to vector<1x2x32xf32>
    tpu.vector_store %arg4[%c3_47, %c0_48, %c0_49], %101 {strides = array<i32>} : memref<8x2x32xf32, #tpu.memory_space<vmem>>, vector<1x2x32xf32>,
    %c4 = arith.constant 4 : index
    %c0_50 = arith.constant 0 : index
    %c0_51 = arith.constant 0 : index
    %102 = vector.load %arg1[%c4, %c0_50, %c0_51] : memref<8x2x96xf32, #tpu.memory_space<vmem>>, vector<1x2x96xf32>
    %103 = vector.shape_cast %102 : vector<1x2x96xf32> to vector<2x96xf32>
    %104 = vector.extract_strided_slice %103 {offsets = [0, 0], sizes = [2, 64], strides = [1, 1]} : vector<2x96xf32> to vector<2x64xf32>
    %cst_52 = arith.constant dense<0.000000e+00> : vector<2x64xf32>
    %105 = tpu.matmul %98, %3, %cst_52 {dimension_numbers = #tpu.dot_dimension_numbers<[1], [0], [0], [1], [0, 0, 1, 1], [], []>} : vector<2x32xf32>, vector<32x64xf32>, vector<2x64xf32> -> vector<2x64xf32>
    %106 = arith.addf %104, %105 : vector<2x64xf32>
    %107 = vector.extract_strided_slice %106 {offsets = [0, 0], sizes = [2, 32], strides = [1, 1]} : vector<2x64xf32> to vector<2x32xf32>
    %cst_53 = arith.constant 0.000000e+00 : f32
    %108 = vector.broadcast %cst_53 : f32 to vector<2x32xf32>
    %109 = arith.cmpf oge, %107, %108 : vector<2x32xf32>
    %cst_54 = arith.constant 0.000000e+00 : f32
    %110 = vector.broadcast %cst_54 : f32 to vector<2x32xf32>
    %111 = arith.select %109, %98, %110 : vector<2x32xi1>, vector<2x32xf32>
    %112 = vector.extract_strided_slice %103 {offsets = [0, 64], sizes = [2, 32], strides = [1, 1]} : vector<2x96xf32> to vector<2x32xf32>
    %cst_55 = arith.constant dense<0.000000e+00> : vector<2x32xf32>
    %113 = tpu.matmul %111, %4, %cst_55 {dimension_numbers = #tpu.dot_dimension_numbers<[1], [0], [0], [1], [0, 0, 1, 1], [], []>} : vector<2x32xf32>, vector<32x32xf32>, vector<2x32xf32> -> vector<2x32xf32>
    %114 = arith.addf %112, %113 : vector<2x32xf32>
    %115 = vector.extract_strided_slice %106 {offsets = [0, 32], sizes = [2, 32], strides = [1, 1]} : vector<2x64xf32> to vector<2x32xf32>
    %cst_56 = arith.constant 0.000000e+00 : f32
    %116 = vector.broadcast %cst_56 : f32 to vector<2x32xf32>
    %117 = arith.cmpf oge, %115, %116 : vector<2x32xf32>
    %cst_57 = arith.constant 0.000000e+00 : f32
    %118 = vector.broadcast %cst_57 : f32 to vector<2x32xf32>
    %119 = arith.cmpf oge, %114, %118 : vector<2x32xf32>
    %120 = arith.extui %119 : vector<2x32xi1> to vector<2x32xi32>
    %121 = arith.sitofp %120 : vector<2x32xi32> to vector<2x32xf32>
    %122 = arith.select %117, %98, %121 : vector<2x32xi1>, vector<2x32xf32>
    %c4_58 = arith.constant 4 : index
    %c0_59 = arith.constant 0 : index
    %c0_60 = arith.constant 0 : index
    %123 = vector.load %arg4[%c4_58, %c0_59, %c0_60] : memref<8x2x32xf32, #tpu.memory_space<vmem>>, vector<1x2x32xf32>
    %124 = vector.shape_cast %123 : vector<1x2x32xf32> to vector<2x32xf32>
    %125 = vector.shape_cast %122 : vector<2x32xf32> to vector<1x2x32xf32>
    tpu.vector_store %arg4[%c4_58, %c0_59, %c0_60], %125 {strides = array<i32>} : memref<8x2x32xf32, #tpu.memory_space<vmem>>, vector<1x2x32xf32>,
    %c5 = arith.constant 5 : index
    %c0_61 = arith.constant 0 : index
    %c0_62 = arith.constant 0 : index
    %126 = vector.load %arg1[%c5, %c0_61, %c0_62] : memref<8x2x96xf32, #tpu.memory_space<vmem>>, vector<1x2x96xf32>
    %127 = vector.shape_cast %126 : vector<1x2x96xf32> to vector<2x96xf32>
    %128 = vector.extract_strided_slice %127 {offsets = [0, 0], sizes = [2, 64], strides = [1, 1]} : vector<2x96xf32> to vector<2x64xf32>
    %cst_63 = arith.constant dense<0.000000e+00> : vector<2x64xf32>
    %129 = tpu.matmul %122, %3, %cst_63 {dimension_numbers = #tpu.dot_dimension_numbers<[1], [0], [0], [1], [0, 0, 1, 1], [], []>} : vector<2x32xf32>, vector<32x64xf32>, vector<2x64xf32> -> vector<2x64xf32>
    %130 = arith.addf %128, %129 : vector<2x64xf32>
    %131 = vector.extract_strided_slice %130 {offsets = [0, 0], sizes = [2, 32], strides = [1, 1]} : vector<2x64xf32> to vector<2x32xf32>
    %cst_64 = arith.constant 0.000000e+00 : f32
    %132 = vector.broadcast %cst_64 : f32 to vector<2x32xf32>
    %133 = arith.cmpf oge, %131, %132 : vector<2x32xf32>
    %cst_65 = arith.constant 0.000000e+00 : f32
    %134 = vector.broadcast %cst_65 : f32 to vector<2x32xf32>
    %135 = arith.select %133, %122, %134 : vector<2x32xi1>, vector<2x32xf32>
    %136 = vector.extract_strided_slice %127 {offsets = [0, 64], sizes = [2, 32], strides = [1, 1]} : vector<2x96xf32> to vector<2x32xf32>
    %cst_66 = arith.constant dense<0.000000e+00> : vector<2x32xf32>
    %137 = tpu.matmul %135, %4, %cst_66 {dimension_numbers = #tpu.dot_dimension_numbers<[1], [0], [0], [1], [0, 0, 1, 1], [], []>} : vector<2x32xf32>, vector<32x32xf32>, vector<2x32xf32> -> vector<2x32xf32>
    %138 = arith.addf %136, %137 : vector<2x32xf32>
    %139 = vector.extract_strided_slice %130 {offsets = [0, 32], sizes = [2, 32], strides = [1, 1]} : vector<2x64xf32> to vector<2x32xf32>
    %cst_67 = arith.constant 0.000000e+00 : f32
    %140 = vector.broadcast %cst_67 : f32 to vector<2x32xf32>
    %141 = arith.cmpf oge, %139, %140 : vector<2x32xf32>
    %cst_68 = arith.constant 0.000000e+00 : f32
    %142 = vector.broadcast %cst_68 : f32 to vector<2x32xf32>
    %143 = arith.cmpf oge, %138, %142 : vector<2x32xf32>
    %144 = arith.extui %143 : vector<2x32xi1> to vector<2x32xi32>
    %145 = arith.sitofp %144 : vector<2x32xi32> to vector<2x32xf32>
    %146 = arith.select %141, %122, %145 : vector<2x32xi1>, vector<2x32xf32>
    %c5_69 = arith.constant 5 : index
    %c0_70 = arith.constant 0 : index
    %c0_71 = arith.constant 0 : index
    %147 = vector.load %arg4[%c5_69, %c0_70, %c0_71] : memref<8x2x32xf32, #tpu.memory_space<vmem>>, vector<1x2x32xf32>
    %148 = vector.shape_cast %147 : vector<1x2x32xf32> to vector<2x32xf32>
    %149 = vector.shape_cast %146 : vector<2x32xf32> to vector<1x2x32xf32>
    tpu.vector_store %arg4[%c5_69, %c0_70, %c0_71], %149 {strides = array<i32>} : memref<8x2x32xf32, #tpu.memory_space<vmem>>, vector<1x2x32xf32>,
    %c6 = arith.constant 6 : index
    %c0_72 = arith.constant 0 : index
    %c0_73 = arith.constant 0 : index
    %150 = vector.load %arg1[%c6, %c0_72, %c0_73] : memref<8x2x96xf32, #tpu.memory_space<vmem>>, vector<1x2x96xf32>
    %151 = vector.shape_cast %150 : vector<1x2x96xf32> to vector<2x96xf32>
    %152 = vector.extract_strided_slice %151 {offsets = [0, 0], sizes = [2, 64], strides = [1, 1]} : vector<2x96xf32> to vector<2x64xf32>
    %cst_74 = arith.constant dense<0.000000e+00> : vector<2x64xf32>
    %153 = tpu.matmul %146, %3, %cst_74 {dimension_numbers = #tpu.dot_dimension_numbers<[1], [0], [0], [1], [0, 0, 1, 1], [], []>} : vector<2x32xf32>, vector<32x64xf32>, vector<2x64xf32> -> vector<2x64xf32>
    %154 = arith.addf %152, %153 : vector<2x64xf32>
    %155 = vector.extract_strided_slice %154 {offsets = [0, 0], sizes = [2, 32], strides = [1, 1]} : vector<2x64xf32> to vector<2x32xf32>
    %cst_75 = arith.constant 0.000000e+00 : f32
    %156 = vector.broadcast %cst_75 : f32 to vector<2x32xf32>
    %157 = arith.cmpf oge, %155, %156 : vector<2x32xf32>
    %cst_76 = arith.constant 0.000000e+00 : f32
    %158 = vector.broadcast %cst_76 : f32 to vector<2x32xf32>
    %159 = arith.select %157, %146, %158 : vector<2x32xi1>, vector<2x32xf32>
    %160 = vector.extract_strided_slice %151 {offsets = [0, 64], sizes = [2, 32], strides = [1, 1]} : vector<2x96xf32> to vector<2x32xf32>
    %cst_77 = arith.constant dense<0.000000e+00> : vector<2x32xf32>
    %161 = tpu.matmul %159, %4, %cst_77 {dimension_numbers = #tpu.dot_dimension_numbers<[1], [0], [0], [1], [0, 0, 1, 1], [], []>} : vector<2x32xf32>, vector<32x32xf32>, vector<2x32xf32> -> vector<2x32xf32>
    %162 = arith.addf %160, %161 : vector<2x32xf32>
    %163 = vector.extract_strided_slice %154 {offsets = [0, 32], sizes = [2, 32], strides = [1, 1]} : vector<2x64xf32> to vector<2x32xf32>
    %cst_78 = arith.constant 0.000000e+00 : f32
    %164 = vector.broadcast %cst_78 : f32 to vector<2x32xf32>
    %165 = arith.cmpf oge, %163, %164 : vector<2x32xf32>
    %cst_79 = arith.constant 0.000000e+00 : f32
    %166 = vector.broadcast %cst_79 : f32 to vector<2x32xf32>
    %167 = arith.cmpf oge, %162, %166 : vector<2x32xf32>
    %168 = arith.extui %167 : vector<2x32xi1> to vector<2x32xi32>
    %169 = arith.sitofp %168 : vector<2x32xi32> to vector<2x32xf32>
    %170 = arith.select %165, %146, %169 : vector<2x32xi1>, vector<2x32xf32>
    %c6_80 = arith.constant 6 : index
    %c0_81 = arith.constant 0 : index
    %c0_82 = arith.constant 0 : index
    %171 = vector.load %arg4[%c6_80, %c0_81, %c0_82] : memref<8x2x32xf32, #tpu.memory_space<vmem>>, vector<1x2x32xf32>
    %172 = vector.shape_cast %171 : vector<1x2x32xf32> to vector<2x32xf32>
    %173 = vector.shape_cast %170 : vector<2x32xf32> to vector<1x2x32xf32>
    tpu.vector_store %arg4[%c6_80, %c0_81, %c0_82], %173 {strides = array<i32>} : memref<8x2x32xf32, #tpu.memory_space<vmem>>, vector<1x2x32xf32>,
    %c7 = arith.constant 7 : index
    %c0_83 = arith.constant 0 : index
    %c0_84 = arith.constant 0 : index
    %174 = vector.load %arg1[%c7, %c0_83, %c0_84] : memref<8x2x96xf32, #tpu.memory_space<vmem>>, vector<1x2x96xf32>
    %175 = vector.shape_cast %174 : vector<1x2x96xf32> to vector<2x96xf32>
    %176 = vector.extract_strided_slice %175 {offsets = [0, 0], sizes = [2, 64], strides = [1, 1]} : vector<2x96xf32> to vector<2x64xf32>
    %cst_85 = arith.constant dense<0.000000e+00> : vector<2x64xf32>
    %177 = tpu.matmul %170, %3, %cst_85 {dimension_numbers = #tpu.dot_dimension_numbers<[1], [0], [0], [1], [0, 0, 1, 1], [], []>} : vector<2x32xf32>, vector<32x64xf32>, vector<2x64xf32> -> vector<2x64xf32>
    %178 = arith.addf %176, %177 : vector<2x64xf32>
    %179 = vector.extract_strided_slice %178 {offsets = [0, 0], sizes = [2, 32], strides = [1, 1]} : vector<2x64xf32> to vector<2x32xf32>
    %cst_86 = arith.constant 0.000000e+00 : f32
    %180 = vector.broadcast %cst_86 : f32 to vector<2x32xf32>
    %181 = arith.cmpf oge, %179, %180 : vector<2x32xf32>
    %cst_87 = arith.constant 0.000000e+00 : f32
    %182 = vector.broadcast %cst_87 : f32 to vector<2x32xf32>
    %183 = arith.select %181, %170, %182 : vector<2x32xi1>, vector<2x32xf32>
    %184 = vector.extract_strided_slice %175 {offsets = [0, 64], sizes = [2, 32], strides = [1, 1]} : vector<2x96xf32> to vector<2x32xf32>
    %cst_88 = arith.constant dense<0.000000e+00> : vector<2x32xf32>
    %185 = tpu.matmul %183, %4, %cst_88 {dimension_numbers = #tpu.dot_dimension_numbers<[1], [0], [0], [1], [0, 0, 1, 1], [], []>} : vector<2x32xf32>, vector<32x32xf32>, vector<2x32xf32> -> vector<2x32xf32>
    %186 = arith.addf %184, %185 : vector<2x32xf32>
    %187 = vector.extract_strided_slice %178 {offsets = [0, 32], sizes = [2, 32], strides = [1, 1]} : vector<2x64xf32> to vector<2x32xf32>
    %cst_89 = arith.constant 0.000000e+00 : f32
    %188 = vector.broadcast %cst_89 : f32 to vector<2x32xf32>
    %189 = arith.cmpf oge, %187, %188 : vector<2x32xf32>
    %cst_90 = arith.constant 0.000000e+00 : f32
    %190 = vector.broadcast %cst_90 : f32 to vector<2x32xf32>
    %191 = arith.cmpf oge, %186, %190 : vector<2x32xf32>
    %192 = arith.extui %191 : vector<2x32xi1> to vector<2x32xi32>
    %193 = arith.sitofp %192 : vector<2x32xi32> to vector<2x32xf32>
    %194 = arith.select %189, %170, %193 : vector<2x32xi1>, vector<2x32xf32>
    %c7_91 = arith.constant 7 : index
    %c0_92 = arith.constant 0 : index
    %c0_93 = arith.constant 0 : index
    %195 = vector.load %arg4[%c7_91, %c0_92, %c0_93] : memref<8x2x32xf32, #tpu.memory_space<vmem>>, vector<1x2x32xf32>
    %196 = vector.shape_cast %195 : vector<1x2x32xf32> to vector<2x32xf32>
    %197 = vector.shape_cast %194 : vector<2x32xf32> to vector<1x2x32xf32>
    tpu.vector_store %arg4[%c7_91, %c0_92, %c0_93], %197 {strides = array<i32>} : memref<8x2x32xf32, #tpu.memory_space<vmem>>, vector<1x2x32xf32>,
    %c0_94 = arith.constant 0 : index
    %c0_95 = arith.constant 0 : index
    %198 = vector.load %arg5[%c0_94, %c0_95] : memref<2x32xf32, #tpu.memory_space<vmem>>, vector<2x32xf32>
    tpu.vector_store %arg5[%c0_94, %c0_95], %194 {strides = array<i32>} : memref<2x32xf32, #tpu.memory_space<vmem>>, vector<2x32xf32>,
    return
  }
  func.func @transform_0(%arg0: i32) -> (i32, i32, i32) {
    %c0_i32 = arith.constant 0 : i32
    %c0_i32_0 = arith.constant 0 : i32
    %c0_i32_1 = arith.constant 0 : i32
    return %arg0, %c0_i32, %c0_i32_0 : i32, i32, i32
  }
  func.func @transform_1(%arg0: i32) -> (i32, i32) {
    %c0_i32 = arith.constant 0 : i32
    %c0_i32_0 = arith.constant 0 : i32
    %c0_i32_1 = arith.constant 0 : i32
    return %c0_i32, %c0_i32_0 : i32, i32
  }
  func.func @transform_2(%arg0: i32) -> (i32, i32) {
    %c0_i32 = arith.constant 0 : i32
    %c0_i32_0 = arith.constant 0 : i32
    %c0_i32_1 = arith.constant 0 : i32
    return %c0_i32, %c0_i32_0 : i32, i32
  }
  func.func @transform_3(%arg0: i32) -> (i32, i32, i32) {
    %c0_i32 = arith.constant 0 : i32
    %c0_i32_0 = arith.constant 0 : i32
    %c0_i32_1 = arith.constant 0 : i32
    return %arg0, %c0_i32, %c0_i32_0 : i32, i32, i32
  }
}

</mosaic_0001>

<llo_original>
// kernel: sgru_forward.2
$region0: #{sgru_forward.2}
  #allocation0 [shape = 'u32[]', space=smem, size = 0x4, offset = 0x4, fixed_abs, tag = 'smem constant byte address 0x4 - core index']
  #allocation1 [shape = 'u32[72,128]{1,0:T(1,128)}', space=vmem, size = 0x9000, scoped, tag = 'internal scratch']
  %s0 = inlined_call_operand.vmem [shape: f32[16,32], index: 0, kind: input, shape index: {}]
  %s1 = inlined_call_operand.vmem [shape: f32[32,96], index: 1, kind: input, shape index: {}]
  %s2 = inlined_call_operand.vmem [shape: f32[16,96], index: 2, kind: output, shape index: {}]
  %s3 = sld [smem:[#allocation0]]
  $region18: #{sgru_forward.2} parent=0
    _
  %s5 = ssub.s32 1, %s3
  %s6 = scalar_select 0, %s5, %s3
  // Predicated region
  $region2: #{sgru_forward.2} parent=0 // pred_check
    _
  $region3: #{sgru_forward.2} parent=0 // pred_check_branch
    %8 = sbr.rel (0) target = $region5
  $region4: #{sgru_forward.2} parent=0 // pred_region
    _
  $region5: #{sgru_forward.2} parent=0 // pred_fallthru
    _
  // Predicated region
  $region6: #{sgru_forward.2} parent=0 // pred_check
    _
  $region7: #{sgru_forward.2} parent=0 // pred_check_branch
    %10 = sbr.rel (0) target = $region9
  $region8: #{sgru_forward.2} parent=0 // pred_region
    _
  $region9: #{sgru_forward.2} parent=0 // pred_fallthru
    _
  %v11 = vld [vmem:[%s0] sm:$0xff]
  %v12 = vld [vmem:[%s0 + $0x8] sm:$0xff]
  %v13 = vld [vmem:[%s1] sm:$0xff]
  %v14 = vld [vmem:[%s1 + $0x8] sm:$0xff]
  %v15 = vld [vmem:[%s1 + $0x10] sm:$0xff]
  %v16 = vld [vmem:[%s1 + $0x18] sm:$0xff]
  %vm17 = vcmask 261120
  %v19 = vsel %vm17, %v11, 0
  %v22 = vsel %vm17, %v12, 0
  %24 = vmatpush.msra.mxu0 0.0
  %25 = vmatpush.msra.mxu0 0.0
  %26 = vmatpush.msra.mxu0 0.0
  %27 = vmatpush.msra.mxu0 0.0
  %28 = vmatpush.msra.mxu0 0.0
  %29 = vmatpush.msra.mxu0 0.0
  %30 = vmatpush.msra.mxu0 0.0
  %31 = vmatpush.msra.mxu0 0.0
  %32 = vmatpush.msra.mxu0 0.0
  %33 = vmatpush.msra.mxu0 0.0
  %34 = vmatpush.msra.mxu0 0.0
  %35 = vmatpush.msra.mxu0 0.0
  %36 = vmatpush.msra.mxu0 %v16
  %37 = vmatpush.msra.mxu0 %v15
  %38 = vmatpush.msra.mxu0 %v14
  %39 = vmatpush.msra.mxu0 %v13
  %40 = vmatmul.f32.gmra.mxu0 %v19
  %v41 = vpop.f32.mrf.mxu0
  %v42 = vadd.f32 0.0, %v41
  %43 = vmatmul.f32.gmra.mxu0 %v22
  %v44 = vpop.f32.mrf.mxu0
  %v45 = vadd.f32 0.0, %v44
  %46 = vdwg.mxu0
  %vm47 = vcmask 785408
  %48 = vst.msk [vmem:[%s2] sm:$0xff] %vm47, %v42
  %49 = vst.msk [vmem:[%s2 + $0x8] sm:$0xff] %vm47, %v45
  // Predicated region
  $region10: #{sgru_forward.2} parent=0 // pred_check
    _
  $region11: #{sgru_forward.2} parent=0 // pred_check_branch
    %51 = sbr.rel (0) target = $region13
  $region12: #{sgru_forward.2} parent=0 // pred_region
    _
  $region13: #{sgru_forward.2} parent=0 // pred_fallthru
    _
  // Predicated region
  $region14: #{sgru_forward.2} parent=0 // pred_check
    _
  $region15: #{sgru_forward.2} parent=0 // pred_check_branch
    %53 = sbr.rel (0) target = $region17
  $region16: #{sgru_forward.2} parent=0 // pred_region
    _
  $region17: #{sgru_forward.2} parent=0 // pred_fallthru
    _

// kernel: sgru_forward.3
$region0: #{sgru_forward.3}
  #allocation0 [shape = 'u32[]', space=smem, size = 0x4, offset = 0x4, fixed_abs, tag = 'smem constant byte address 0x4 - core index']
  #allocation1 [shape = 'u32[72,128]{1,0:T(1,128)}', space=vmem, size = 0x9000, scoped, tag = 'internal scratch']
  #allocation2 [shape = 'f32[2,32]{1,0:T(2,128)}', space=vmem, size = 0x400, scoped, tag = 'scratch operand']
  %s0 = inlined_call_operand.vmem [shape: f32[8,2,96], index: 0, kind: input, shape index: {}]
  %s1 = inlined_call_operand.vmem [shape: f32[32,64], index: 1, kind: input, shape index: {}]
  %s2 = inlined_call_operand.vmem [shape: f32[32,32], index: 2, kind: input, shape index: {}]
  %s3 = inlined_call_operand.vmem [shape: f32[8,2,32], index: 3, kind: output, shape index: {}]
  %s4 = sld [smem:[#allocation0]]
  $region26: #{sgru_forward.3} parent=0
    _
  %s6 = ssub.s32 1, %s4
  %s7 = scalar_select 0, %s6, %s4
  // Predicated region
  $region2: #{sgru_forward.3} parent=0 // pred_check
    _
  $region3: #{sgru_forward.3} parent=0 // pred_check_branch
    %9 = sbr.rel (0) target = $region5
  $region4: #{sgru_forward.3} parent=0 // pred_region
    _
  $region5: #{sgru_forward.3} parent=0 // pred_fallthru
    _
  // Predicated region
  $region6: #{sgru_forward.3} parent=0 // pred_check
    _
  $region7: #{sgru_forward.3} parent=0 // pred_check_branch
    %11 = sbr.rel (0) target = $region9
  $region8: #{sgru_forward.3} parent=0 // pred_region
    _
  $region9: #{sgru_forward.3} parent=0 // pred_fallthru
    _
  // Predicated region
  $region10: #{sgru_forward.3} parent=0 // pred_check
    _
  $region11: #{sgru_forward.3} parent=0 // pred_check_branch
    %13 = sbr.rel (0) target = $region13
  $region12: #{sgru_forward.3} parent=0 // pred_region
    _
  $region13: #{sgru_forward.3} parent=0 // pred_fallthru
    _
  %p14 = scmp.eq.s32.totalorder 0, 0
  // Predicated region
  $region14: #{sgru_forward.3} parent=0 // pred_check
    %p15 = pneg %p14
  $region15: #{sgru_forward.3} parent=0 // pred_check_branch
    %17 = sbr.rel (%p15) target = $region17
  $region16: #{sgru_forward.3} parent=0 // pred_region
    %vm18 = vcmask 254976
    %19 = vst.msk [vmem:[#allocation2] sm:$0x3] %vm18, 0.0
  $region17: #{sgru_forward.3} parent=0 // pred_fallthru
    _
  %v20 = vld [vmem:[%s1] sm:$0xff]
  %v21 = vld [vmem:[%s1 + $0x8] sm:$0xff]
  %v22 = vld [vmem:[%s1 + $0x10] sm:$0xff]
  %v23 = vld [vmem:[%s1 + $0x18] sm:$0xff]
  %v24 = vld [vmem:[%s2] sm:$0xff]
  %v25 = vld [vmem:[%s2 + $0x8] sm:$0xff]
  %v26 = vld [vmem:[%s2 + $0x10] sm:$0xff]
  %v27 = vld [vmem:[%s2 + $0x18] sm:$0xff]
  %v28 = vld [vmem:[#allocation2] sm:$0x3]
  %v29 = vld [vmem:[%s0] sm:$0x3]
  %vm30 = vcmask 261120
  %v32 = vsel %vm30, %v28, 0
  %34 = vmatpush.msra.mxu0 0.0
  %35 = vmatpush.msra.mxu0 0.0
  %36 = vmatpush.msra.mxu0 0.0
  %37 = vmatpush.msra.mxu0 0.0
  %38 = vmatpush.msra.mxu0 0.0
  %39 = vmatpush.msra.mxu0 0.0
  %40 = vmatpush.msra.mxu0 0.0
  %41 = vmatpush.msra.mxu0 0.0
  %42 = vmatpush.msra.mxu0 0.0
  %43 = vmatpush.msra.mxu0 0.0
  %44 = vmatpush.msra.mxu0 0.0
  %45 = vmatpush.msra.mxu0 0.0
  %46 = vmatpush.msra.mxu0 %v23
  %47 = vmatpush.msra.mxu0 %v22
  %48 = vmatpush.msra.mxu0 %v21
  %49 = vmatpush.msra.mxu0 %v20
  %50 = vmatmul.f32.gmra.mxu0 %v32
  %v51 = vpop.f32.mrf.mxu0
  %v52 = vadd.f32 0.0, %v51
  %53 = vdwg.mxu0
  %v54 = vadd.f32 %v29, %v52
  %vm55 = vcmp.ge.f32.partialorder %v54, 0.0
  %v56 = vsel %vm55, %v28, 0.0
  %v58 = vsel %vm30, %v56, 0
  %60 = vmatpush.msra.mxu0 0.0
  %61 = vmatpush.msra.mxu0 0.0
  %62 = vmatpush.msra.mxu0 0.0
  %63 = vmatpush.msra.mxu0 0.0
  %64 = vmatpush.msra.mxu0 0.0
  %65 = vmatpush.msra.mxu0 0.0
  %66 = vmatpush.msra.mxu0 0.0
  %67 = vmatpush.msra.mxu0 0.0
  %68 = vmatpush.msra.mxu0 0.0
  %69 = vmatpush.msra.mxu0 0.0
  %70 = vmatpush.msra.mxu0 0.0
  %71 = vmatpush.msra.mxu0 0.0
  %72 = vmatpush.msra.mxu0 %v27
  %73 = vmatpush.msra.mxu0 %v26
  %74 = vmatpush.msra.mxu0 %v25
  %75 = vmatpush.msra.mxu0 %v24
  %76 = vmatmul.f32.gmra.mxu0 %v58
  %v77 = vpop.f32.mrf.mxu0
  %v78 = vadd.f32 0.0, %v77
  %79 = vdwg.mxu0
  %81 = vrot.lane.b32.xlu0 %v78, 64
  %v82 = vpop.permute.xlu0 %81
  %v84 = vadd.f32 %v29, %v82
  %vm85 = vcmp.ge.f32.partialorder %v84, 0.0
  %v86 = vsel %vm85, 1, 0
  %v87 = vcvt.s32.f32 %v86
  %88 = vrot.lane.b32.xlu0 %v28, 32
  %v89 = vpop.permute.xlu0 %88
  %92 = vrot.lane.b32.xlu0 %v87, 96
  %v93 = vpop.permute.xlu0 %92
  %v95 = vsel %vm55, %v89, %v93
  %97 = vrot.lane.b32.xlu0 %v95, 96
  %v98 = vpop.permute.xlu0 %97
  %vm100 = vcmask 254976
  %101 = vst.msk [vmem:[%s3] sm:$0x3] %vm100, %v98
  %s102 = scalar_lea.vmem %s0, 2
  %v103 = vld [vmem:[%s102] sm:$0x3]
  %v104 = vsel %vm30, %v98, 0
  %106 = vmatpush.msra.mxu0 0.0
  %107 = vmatpush.msra.mxu0 0.0
  %108 = vmatpush.msra.mxu0 0.0
  %109 = vmatpush.msra.mxu0 0.0
  %110 = vmatpush.msra.mxu0 0.0
  %111 = vmatpush.msra.mxu0 0.0
  %112 = vmatpush.msra.mxu0 0.0
  %113 = vmatpush.msra.mxu0 0.0
  %114 = vmatpush.msra.mxu0 0.0
  %115 = vmatpush.msra.mxu0 0.0
  %116 = vmatpush.msra.mxu0 0.0
  %117 = vmatpush.msra.mxu0 0.0
  %118 = vmatpush.msra.mxu0 %v23
  %119 = vmatpush.msra.mxu0 %v22
  %120 = vmatpush.msra.mxu0 %v21
  %121 = vmatpush.msra.mxu0 %v20
  %122 = vmatmul.f32.gmra.mxu0 %v104
  %v123 = vpop.f32.mrf.mxu0
  %v124 = vadd.f32 0.0, %v123
  %125 = vdwg.mxu0
  %v126 = vadd.f32 %v103, %v124
  %vm127 = vcmp.ge.f32.partialorder %v126, 0.0
  %v128 = vsel %vm127, %v98, 0.0
  %v130 = vsel %vm30, %v128, 0
  %132 = vmatpush.msra.mxu0 0.0
  %133 = vmatpush.msra.mxu0 0.0
  %134 = vmatpush.msra.mxu0 0.0
  %135 = vmatpush.msra.mxu0 0.0
  %136 = vmatpush.msra.mxu0 0.0
  %137 = vmatpush.msra.mxu0 0.0
  %138 = vmatpush.msra.mxu0 0.0
  %139 = vmatpush.msra.mxu0 0.0
  %140 = vmatpush.msra.mxu0 0.0
  %141 = vmatpush.msra.mxu0 0.0
  %142 = vmatpush.msra.mxu0 0.0
  %143 = vmatpush.msra.mxu0 0.0
  %144 = vmatpush.msra.mxu0 %v27
  %145 = vmatpush.msra.mxu0 %v26
  %146 = vmatpush.msra.mxu0 %v25
  %147 = vmatpush.msra.mxu0 %v24
  %148 = vmatmul.f32.gmra.mxu0 %v130
  %v149 = vpop.f32.mrf.mxu0
  %v150 = vadd.f32 0.0, %v149
  %151 = vdwg.mxu0
  %153 = vrot.lane.b32.xlu0 %v150, 64
  %v154 = vpop.permute.xlu0 %153
  %v156 = vadd.f32 %v103, %v154
  %vm157 = vcmp.ge.f32.partialorder %v156, 0.0
  %v158 = vsel %vm157, 1, 0
  %v159 = vcvt.s32.f32 %v158
  %161 = vrot.lane.b32.xlu0 %v159, 96
  %v162 = vpop.permute.xlu0 %161
  %v164 = vsel %vm127, %v95, %v162
  %166 = vrot.lane.b32.xlu0 %v164, 96
  %v167 = vpop.permute.xlu0 %166
  %s169 = scalar_lea.vmem %s3, 2
  %170 = vst.msk [vmem:[%s169] sm:$0x3] %vm100, %v167
  %s171 = scalar_lea.vmem %s0, 4
  %v172 = vld [vmem:[%s171] sm:$0x3]
  %v173 = vsel %vm30, %v167, 0
  %175 = vmatpush.msra.mxu0 0.0
  %176 = vmatpush.msra.mxu0 0.0
  %177 = vmatpush.msra.mxu0 0.0
  %178 = vmatpush.msra.mxu0 0.0
  %179 = vmatpush.msra.mxu0 0.0
  %180 = vmatpush.msra.mxu0 0.0
  %181 = vmatpush.msra.mxu0 0.0
  %182 = vmatpush.msra.mxu0 0.0
  %183 = vmatpush.msra.mxu0 0.0
  %184 = vmatpush.msra.mxu0 0.0
  %185 = vmatpush.msra.mxu0 0.0
  %186 = vmatpush.msra.mxu0 0.0
  %187 = vmatpush.msra.mxu0 %v23
  %188 = vmatpush.msra.mxu0 %v22
  %189 = vmatpush.msra.mxu0 %v21
  %190 = vmatpush.msra.mxu0 %v20
  %191 = vmatmul.f32.gmra.mxu0 %v173
  %v192 = vpop.f32.mrf.mxu0
  %v193 = vadd.f32 0.0, %v192
  %194 = vdwg.mxu0
  %v195 = vadd.f32 %v172, %v193
  %vm196 = vcmp.ge.f32.partialorder %v195, 0.0
  %v197 = vsel %vm196, %v167, 0.0
  %v199 = vsel %vm30, %v197, 0
  %201 = vmatpush.msra.mxu0 0.0
  %202 = vmatpush.msra.mxu0 0.0
  %203 = vmatpush.msra.mxu0 0.0
  %204 = vmatpush.msra.mxu0 0.0
  %205 = vmatpush.msra.mxu0 0.0
  %206 = vmatpush.msra.mxu0 0.0
  %207 = vmatpush.msra.mxu0 0.0
  %208 = vmatpush.msra.mxu0 0.0
  %209 = vmatpush.msra.mxu0 0.0
  %210 = vmatpush.msra.mxu0 0.0
  %211 = vmatpush.msra.mxu0 0.0
  %212 = vmatpush.msra.mxu0 0.0
  %213 = vmatpush.msra.mxu0 %v27
  %214 = vmatpush.msra.mxu0 %v26
  %215 = vmatpush.msra.mxu0 %v25
  %216 = vmatpush.msra.mxu0 %v24
  %217 = vmatmul.f32.gmra.mxu0 %v199
  %v218 = vpop.f32.mrf.mxu0
  %v219 = vadd.f32 0.0, %v218
  %220 = vdwg.mxu0
  %222 = vrot.lane.b32.xlu0 %v219, 64
  %v223 = vpop.permute.xlu0 %222
  %v225 = vadd.f32 %v172, %v223
  %vm226 = vcmp.ge.f32.partialorder %v225, 0.0
  %v227 = vsel %vm226, 1, 0
  %v228 = vcvt.s32.f32 %v227
  %230 = vrot.lane.b32.xlu0 %v228, 96
  %v231 = vpop.permute.xlu0 %230
  %v233 = vsel %vm196, %v164, %v231
  %235 = vrot.lane.b32.xlu0 %v233, 96
  %v236 = vpop.permute.xlu0 %235
  %s238 = scalar_lea.vmem %s3, 4
  %239 = vst.msk [vmem:[%s238] sm:$0x3] %vm100, %v236
  %s240 = scalar_lea.vmem %s0, 6
  %v241 = vld [vmem:[%s240] sm:$0x3]
  %v242 = vsel %vm30, %v236, 0
  %244 = vmatpush.msra.mxu0 0.0
  %245 = vmatpush.msra.mxu0 0.0
  %246 = vmatpush.msra.mxu0 0.0
  %247 = vmatpush.msra.mxu0 0.0
  %248 = vmatpush.msra.mxu0 0.0
  %249 = vmatpush.msra.mxu0 0.0
  %250 = vmatpush.msra.mxu0 0.0
  %251 = vmatpush.msra.mxu0 0.0
  %252 = vmatpush.msra.mxu0 0.0
  %253 = vmatpush.msra.mxu0 0.0
  %254 = vmatpush.msra.mxu0 0.0
  %255 = vmatpush.msra.mxu0 0.0
  %256 = vmatpush.msra.mxu0 %v23
  %257 = vmatpush.msra.mxu0 %v22
  %258 = vmatpush.msra.mxu0 %v21
  %259 = vmatpush.msra.mxu0 %v20
  %260 = vmatmul.f32.gmra.mxu0 %v242
  %v261 = vpop.f32.mrf.mxu0
  %v262 = vadd.f32 0.0, %v261
  %263 = vdwg.mxu0
  %v264 = vadd.f32 %v241, %v262
  %vm265 = vcmp.ge.f32.partialorder %v264, 0.0
  %v266 = vsel %vm265, %v236, 0.0
  %v268 = vsel %vm30, %v266, 0
  %270 = vmatpush.msra.mxu0 0.0
  %271 = vmatpush.msra.mxu0 0.0
  %272 = vmatpush.msra.mxu0 0.0
  %273 = vmatpush.msra.mxu0 0.0
  %274 = vmatpush.msra.mxu0 0.0
  %275 = vmatpush.msra.mxu0 0.0
  %276 = vmatpush.msra.mxu0 0.0
  %277 = vmatpush.msra.mxu0 0.0
  %278 = vmatpush.msra.mxu0 0.0
  %279 = vmatpush.msra.mxu0 0.0
  %280 = vmatpush.msra.mxu0 0.0
  %281 = vmatpush.msra.mxu0 0.0
  %282 = vmatpush.msra.mxu0 %v27
  %283 = vmatpush.msra.mxu0 %v26
  %284 = vmatpush.msra.mxu0 %v25
  %285 = vmatpush.msra.mxu0 %v24
  %286 = vmatmul.f32.gmra.mxu0 %v268
  %v287 = vpop.f32.mrf.mxu0
  %v288 = vadd.f32 0.0, %v287
  %289 = vdwg.mxu0
  %291 = vrot.lane.b32.xlu0 %v288, 64
  %v292 = vpop.permute.xlu0 %291
  %v294 = vadd.f32 %v241, %v292
  %vm295 = vcmp.ge.f32.partialorder %v294, 0.0
  %v296 = vsel %vm295, 1, 0
  %v297 = vcvt.s32.f32 %v296
  %299 = vrot.lane.b32.xlu0 %v297, 96
  %v300 = vpop.permute.xlu0 %299
  %v302 = vsel %vm265, %v233, %v300
  %304 = vrot.lane.b32.xlu0 %v302, 96
  %v305 = vpop.permute.xlu0 %304
  %s307 = scalar_lea.vmem %s3, 6
  %308 = vst.msk [vmem:[%s307] sm:$0x3] %vm100, %v305
  %s309 = scalar_lea.vmem %s0, 8
  %v310 = vld [vmem:[%s309] sm:$0x3]
  %v311 = vsel %vm30, %v305, 0
  %313 = vmatpush.msra.mxu0 0.0
  %314 = vmatpush.msra.mxu0 0.0
  %315 = vmatpush.msra.mxu0 0.0
  %316 = vmatpush.msra.mxu0 0.0
  %317 = vmatpush.msra.mxu0 0.0
  %318 = vmatpush.msra.mxu0 0.0
  %319 = vmatpush.msra.mxu0 0.0
  %320 = vmatpush.msra.mxu0 0.0
  %321 = vmatpush.msra.mxu0 0.0
  %322 = vmatpush.msra.mxu0 0.0
  %323 = vmatpush.msra.mxu0 0.0
  %324 = vmatpush.msra.mxu0 0.0
  %325 = vmatpush.msra.mxu0 %v23
  %326 = vmatpush.msra.mxu0 %v22
  %327 = vmatpush.msra.mxu0 %v21
  %328 = vmatpush.msra.mxu0 %v20
  %329 = vmatmul.f32.gmra.mxu0 %v311
  %v330 = vpop.f32.mrf.mxu0
  %v331 = vadd.f32 0.0, %v330
  %332 = vdwg.mxu0
  %v333 = vadd.f32 %v310, %v331
  %vm334 = vcmp.ge.f32.partialorder %v333, 0.0
  %v335 = vsel %vm334, %v305, 0.0
  %v337 = vsel %vm30, %v335, 0
  %339 = vmatpush.msra.mxu0 0.0
  %340 = vmatpush.msra.mxu0 0.0
  %341 = vmatpush.msra.mxu0 0.0
  %342 = vmatpush.msra.mxu0 0.0
  %343 = vmatpush.msra.mxu0 0.0
  %344 = vmatpush.msra.mxu0 0.0
  %345 = vmatpush.msra.mxu0 0.0
  %346 = vmatpush.msra.mxu0 0.0
  %347 = vmatpush.msra.mxu0 0.0
  %348 = vmatpush.msra.mxu0 0.0
  %349 = vmatpush.msra.mxu0 0.0
  %350 = vmatpush.msra.mxu0 0.0
  %351 = vmatpush.msra.mxu0 %v27
  %352 = vmatpush.msra.mxu0 %v26
  %353 = vmatpush.msra.mxu0 %v25
  %354 = vmatpush.msra.mxu0 %v24
  %355 = vmatmul.f32.gmra.mxu0 %v337
  %v356 = vpop.f32.mrf.mxu0
  %v357 = vadd.f32 0.0, %v356
  %358 = vdwg.mxu0
  %360 = vrot.lane.b32.xlu0 %v357, 64
  %v361 = vpop.permute.xlu0 %360
  %v363 = vadd.f32 %v310, %v361
  %vm364 = vcmp.ge.f32.partialorder %v363, 0.0
  %v365 = vsel %vm364, 1, 0
  %v366 = vcvt.s32.f32 %v365
  %368 = vrot.lane.b32.xlu0 %v366, 96
  %v369 = vpop.permute.xlu0 %368
  %v371 = vsel %vm334, %v302, %v369
  %373 = vrot.lane.b32.xlu0 %v371, 96
  %v374 = vpop.permute.xlu0 %373
  %s376 = scalar_lea.vmem %s3, 8
  %377 = vst.msk [vmem:[%s376] sm:$0x3] %vm100, %v374
  %s378 = scalar_lea.vmem %s0, 10
  %v379 = vld [vmem:[%s378] sm:$0x3]
  %v380 = vsel %vm30, %v374, 0
  %382 = vmatpush.msra.mxu0 0.0
  %383 = vmatpush.msra.mxu0 0.0
  %384 = vmatpush.msra.mxu0 0.0
  %385 = vmatpush.msra.mxu0 0.0
  %386 = vmatpush.msra.mxu0 0.0
  %387 = vmatpush.msra.mxu0 0.0
  %388 = vmatpush.msra.mxu0 0.0
  %389 = vmatpush.msra.mxu0 0.0
  %390 = vmatpush.msra.mxu0 0.0
  %391 = vmatpush.msra.mxu0 0.0
  %392 = vmatpush.msra.mxu0 0.0
  %393 = vmatpush.msra.mxu0 0.0
  %394 = vmatpush.msra.mxu0 %v23
  %395 = vmatpush.msra.mxu0 %v22
  %396 = vmatpush.msra.mxu0 %v21
  %397 = vmatpush.msra.mxu0 %v20
  %398 = vmatmul.f32.gmra.mxu0 %v380
  %v399 = vpop.f32.mrf.mxu0
  %v400 = vadd.f32 0.0, %v399
  %401 = vdwg.mxu0
  %v402 = vadd.f32 %v379, %v400
  %vm403 = vcmp.ge.f32.partialorder %v402, 0.0
  %v404 = vsel %vm403, %v374, 0.0
  %v406 = vsel %vm30, %v404, 0
  %408 = vmatpush.msra.mxu0 0.0
  %409 = vmatpush.msra.mxu0 0.0
  %410 = vmatpush.msra.mxu0 0.0
  %411 = vmatpush.msra.mxu0 0.0
  %412 = vmatpush.msra.mxu0 0.0
  %413 = vmatpush.msra.mxu0 0.0
  %414 = vmatpush.msra.mxu0 0.0
  %415 = vmatpush.msra.mxu0 0.0
  %416 = vmatpush.msra.mxu0 0.0
  %417 = vmatpush.msra.mxu0 0.0
  %418 = vmatpush.msra.mxu0 0.0
  %419 = vmatpush.msra.mxu0 0.0
  %420 = vmatpush.msra.mxu0 %v27
  %421 = vmatpush.msra.mxu0 %v26
  %422 = vmatpush.msra.mxu0 %v25
  %423 = vmatpush.msra.mxu0 %v24
  %424 = vmatmul.f32.gmra.mxu0 %v406
  %v425 = vpop.f32.mrf.mxu0
  %v426 = vadd.f32 0.0, %v425
  %427 = vdwg.mxu0
  %429 = vrot.lane.b32.xlu0 %v426, 64
  %v430 = vpop.permute.xlu0 %429
  %v432 = vadd.f32 %v379, %v430
  %vm433 = vcmp.ge.f32.partialorder %v432, 0.0
  %v434 = vsel %vm433, 1, 0
  %v435 = vcvt.s32.f32 %v434
  %437 = vrot.lane.b32.xlu0 %v435, 96
  %v438 = vpop.permute.xlu0 %437
  %v440 = vsel %vm403, %v371, %v438
  %442 = vrot.lane.b32.xlu0 %v440, 96
  %v443 = vpop.permute.xlu0 %442
  %s445 = scalar_lea.vmem %s3, 10
  %446 = vst.msk [vmem:[%s445] sm:$0x3] %vm100, %v443
  %s447 = scalar_lea.vmem %s0, 12
  %v448 = vld [vmem:[%s447] sm:$0x3]
  %v449 = vsel %vm30, %v443, 0
  %451 = vmatpush.msra.mxu0 0.0
  %452 = vmatpush.msra.mxu0 0.0
  %453 = vmatpush.msra.mxu0 0.0
  %454 = vmatpush.msra.mxu0 0.0
  %455 = vmatpush.msra.mxu0 0.0
  %456 = vmatpush.msra.mxu0 0.0
  %457 = vmatpush.msra.mxu0 0.0
  %458 = vmatpush.msra.mxu0 0.0
  %459 = vmatpush.msra.mxu0 0.0
  %460 = vmatpush.msra.mxu0 0.0
  %461 = vmatpush.msra.mxu0 0.0
  %462 = vmatpush.msra.mxu0 0.0
  %463 = vmatpush.msra.mxu0 %v23
  %464 = vmatpush.msra.mxu0 %v22
  %465 = vmatpush.msra.mxu0 %v21
  %466 = vmatpush.msra.mxu0 %v20
  %467 = vmatmul.f32.gmra.mxu0 %v449
  %v468 = vpop.f32.mrf.mxu0
  %v469 = vadd.f32 0.0, %v468
  %470 = vdwg.mxu0
  %v471 = vadd.f32 %v448, %v469
  %vm472 = vcmp.ge.f32.partialorder %v471, 0.0
  %v473 = vsel %vm472, %v443, 0.0
  %v475 = vsel %vm30, %v473, 0
  %477 = vmatpush.msra.mxu0 0.0
  %478 = vmatpush.msra.mxu0 0.0
  %479 = vmatpush.msra.mxu0 0.0
  %480 = vmatpush.msra.mxu0 0.0
  %481 = vmatpush.msra.mxu0 0.0
  %482 = vmatpush.msra.mxu0 0.0
  %483 = vmatpush.msra.mxu0 0.0
  %484 = vmatpush.msra.mxu0 0.0
  %485 = vmatpush.msra.mxu0 0.0
  %486 = vmatpush.msra.mxu0 0.0
  %487 = vmatpush.msra.mxu0 0.0
  %488 = vmatpush.msra.mxu0 0.0
  %489 = vmatpush.msra.mxu0 %v27
  %490 = vmatpush.msra.mxu0 %v26
  %491 = vmatpush.msra.mxu0 %v25
  %492 = vmatpush.msra.mxu0 %v24
  %493 = vmatmul.f32.gmra.mxu0 %v475
  %v494 = vpop.f32.mrf.mxu0
  %v495 = vadd.f32 0.0, %v494
  %496 = vdwg.mxu0
  %498 = vrot.lane.b32.xlu0 %v495, 64
  %v499 = vpop.permute.xlu0 %498
  %v501 = vadd.f32 %v448, %v499
  %vm502 = vcmp.ge.f32.partialorder %v501, 0.0
  %v503 = vsel %vm502, 1, 0
  %v504 = vcvt.s32.f32 %v503
  %506 = vrot.lane.b32.xlu0 %v504, 96
  %v507 = vpop.permute.xlu0 %506
  %v509 = vsel %vm472, %v440, %v507
  %511 = vrot.lane.b32.xlu0 %v509, 96
  %v512 = vpop.permute.xlu0 %511
  %s514 = scalar_lea.vmem %s3, 12
  %515 = vst.msk [vmem:[%s514] sm:$0x3] %vm100, %v512
  %s516 = scalar_lea.vmem %s0, 14
  %v517 = vld [vmem:[%s516] sm:$0x3]
  %v518 = vsel %vm30, %v512, 0
  %520 = vmatpush.msra.mxu0 0.0
  %521 = vmatpush.msra.mxu0 0.0
  %522 = vmatpush.msra.mxu0 0.0
  %523 = vmatpush.msra.mxu0 0.0
  %524 = vmatpush.msra.mxu0 0.0
  %525 = vmatpush.msra.mxu0 0.0
  %526 = vmatpush.msra.mxu0 0.0
  %527 = vmatpush.msra.mxu0 0.0
  %528 = vmatpush.msra.mxu0 0.0
  %529 = vmatpush.msra.mxu0 0.0
  %530 = vmatpush.msra.mxu0 0.0
  %531 = vmatpush.msra.mxu0 0.0
  %532 = vmatpush.msra.mxu0 %v23
  %533 = vmatpush.msra.mxu0 %v22
  %534 = vmatpush.msra.mxu0 %v21
  %535 = vmatpush.msra.mxu0 %v20
  %536 = vmatmul.f32.gmra.mxu0 %v518
  %v537 = vpop.f32.mrf.mxu0
  %v538 = vadd.f32 0.0, %v537
  %539 = vdwg.mxu0
  %v540 = vadd.f32 %v517, %v538
  %vm541 = vcmp.ge.f32.partialorder %v540, 0.0
  %v542 = vsel %vm541, %v512, 0.0
  %v544 = vsel %vm30, %v542, 0
  %546 = vmatpush.msra.mxu0 0.0
  %547 = vmatpush.msra.mxu0 0.0
  %548 = vmatpush.msra.mxu0 0.0
  %549 = vmatpush.msra.mxu0 0.0
  %550 = vmatpush.msra.mxu0 0.0
  %551 = vmatpush.msra.mxu0 0.0
  %552 = vmatpush.msra.mxu0 0.0
  %553 = vmatpush.msra.mxu0 0.0
  %554 = vmatpush.msra.mxu0 0.0
  %555 = vmatpush.msra.mxu0 0.0
  %556 = vmatpush.msra.mxu0 0.0
  %557 = vmatpush.msra.mxu0 0.0
  %558 = vmatpush.msra.mxu0 %v27
  %559 = vmatpush.msra.mxu0 %v26
  %560 = vmatpush.msra.mxu0 %v25
  %561 = vmatpush.msra.mxu0 %v24
  %562 = vmatmul.f32.gmra.mxu0 %v544
  %v563 = vpop.f32.mrf.mxu0
  %v564 = vadd.f32 0.0, %v563
  %565 = vdwg.mxu0
  %567 = vrot.lane.b32.xlu0 %v564, 64
  %v568 = vpop.permute.xlu0 %567
  %v570 = vadd.f32 %v517, %v568
  %vm571 = vcmp.ge.f32.partialorder %v570, 0.0
  %v572 = vsel %vm571, 1, 0
  %v573 = vcvt.s32.f32 %v572
  %575 = vrot.lane.b32.xlu0 %v573, 96
  %v576 = vpop.permute.xlu0 %575
  %v578 = vsel %vm541, %v509, %v576
  %580 = vrot.lane.b32.xlu0 %v578, 96
  %v581 = vpop.permute.xlu0 %580
  %s583 = scalar_lea.vmem %s3, 14
  %584 = vst.msk [vmem:[%s583] sm:$0x3] %vm100, %v581
  %585 = vst.msk [vmem:[#allocation2] sm:$0x3] %vm100, %v581
  // Predicated region
  $region18: #{sgru_forward.3} parent=0 // pred_check
    _
  $region19: #{sgru_forward.3} parent=0 // pred_check_branch
    %587 = sbr.rel (0) target = $region21
  $region20: #{sgru_forward.3} parent=0 // pred_region
    _
  $region21: #{sgru_forward.3} parent=0 // pred_fallthru
    _
  // Predicated region
  $region22: #{sgru_forward.3} parent=0 // pred_check
    _
  $region23: #{sgru_forward.3} parent=0 // pred_check_branch
    %589 = sbr.rel (0) target = $region25
  $region24: #{sgru_forward.3} parent=0 // pred_region
    _
  $region25: #{sgru_forward.3} parent=0 // pred_fallthru
    _

</llo_original>
